<compile_context>
chip_gen: v6e
topology: v6e:2x2x1
jax: 0.10.0
libtpu: 0.0.40
codegen_flags: <defaults>
</compile_context>

<pallas_src>
import functools

import jax
import jax.numpy as jnp
from jax import lax
from jax.experimental import pallas as pl
from jax.experimental.pallas import tpu as pltpu

_LANES = 128
_SUBLANES = 8


def _chip_config():
    """Per-generation (tile_rows, num_cores, vmem_limit_bytes)."""
    kind = ""
    try:
        kind = jax.devices()[0].device_kind.lower()
    except Exception:  # pragma: no cover - defensive
        pass
    if "v7" in kind or "7x" in kind:
        # 2 TensorCores, 64 MiB physical VMEM: 8 MiB tiles -> 32 MiB of
        # double-buffered inputs; raise the scoped limit but keep headroom.
        return 16384, 2, 48 * 1024 * 1024
    if "v6" in kind:
        # 1 TC; 4 MiB tiles -> 16 MiB of input buffers fits the 32 MiB default.
        return 8192, 1, None
    # v5e / unknown: conservative -- 2 MiB tiles (8 MiB buffers) fit the
    # 16 MiB default scoped-VMEM limit without any flags.
    return 4096, 1, None


def _mse_kernel(pred_ref, tgt_ref, out_ref, *,
                tile_rows, chunk, rows, steps, need_mask, unroll):
    s = pl.program_id(1)

    @pl.when(s == 0)
    def _():
        out_ref[...] = jnp.zeros_like(out_ref)

    num_chunks = tile_rows // chunk
    row_base = (pl.program_id(0) * steps + s) * tile_rows

    def chunk_sum(start, acc, masked):
        d = (pred_ref[pl.ds(start, chunk), :].astype(jnp.float32)
             - tgt_ref[pl.ds(start, chunk), :].astype(jnp.float32))
        sq = d * d
        if masked:
            local = lax.broadcasted_iota(jnp.int32, (chunk, _LANES), 0)
            sq = jnp.where(row_base + start + local < rows, sq,
                           jnp.float32(0.0))
        # (chunk,128) -> (chunk//8, 8, 128) is a layout-preserving relabel;
        # summing axis 0 is pure VALU vreg adds (no cross-lane XLU work).
        return acc + jnp.sum(
            sq.reshape(chunk // _SUBLANES, _SUBLANES, _LANES), axis=0)

    def tile_partial(masked):
        init = jnp.zeros((_SUBLANES, _LANES), jnp.float32)
        if num_chunks == 1:
            return chunk_sum(0, init, masked)
        return lax.fori_loop(
            0, num_chunks,
            lambda i, acc: chunk_sum(
                pl.multiple_of(i * chunk, chunk), acc, masked),
            init, unroll=unroll)

    if need_mask:
        is_full = row_base + tile_rows <= rows

        @pl.when(is_full)
        def _():
            out_ref[...] += tile_partial(False)[None]

        @pl.when(jnp.logical_not(is_full))
        def _():
            out_ref[...] += tile_partial(True)[None]
    else:
        out_ref[...] += tile_partial(False)[None]


def mse_criterion(pred, target, *, tile_rows=None, num_cores=None):
    """torch.mean((pred - target) ** 2) semantics; returns an f32 scalar."""
    assert pred.shape == target.shape, "pred/target shape mismatch"
    n = int(pred.size)

    auto_tile, auto_cores, vmem_limit = _chip_config()
    if tile_rows is None:
        tile_rows = auto_tile
    if num_cores is None:
        num_cores = auto_cores

    p = pred.reshape(-1)
    t = target.reshape(-1)

    rows = n // _LANES
    n_main = rows * _LANES

    # <128-element tail handled in plain JAX (no O(n) pad/copy of the inputs).
    tail = jnp.float32(0.0)
    if n_main < n:
        dt = p[n_main:].astype(jnp.float32) - t[n_main:].astype(jnp.float32)
        tail = jnp.sum(dt * dt)

    if rows == 0:
        return tail / jnp.float32(n)

    # Zero-copy reshape to a lane-dense slab when n % 128 == 0; the (rare)
    # prefix slice only covers the aligned part for unaligned sizes.
    p2 = (p if n_main == n else p[:n_main]).reshape(rows, _LANES)
    t2 = (t if n_main == n else t[:n_main]).reshape(rows, _LANES)

    rows8 = ((rows + _SUBLANES - 1) // _SUBLANES) * _SUBLANES
    tile_rows = min(tile_rows, rows8)
    assert tile_rows % _SUBLANES == 0

    # Sublane-chunk size for the in-kernel streaming loop (bounds VMEM temps
    # to <= ~1 MiB even for 8 MiB tiles).
    chunk = _SUBLANES
    for cand in (1024, 512, 256, 128, 64, 32, 16, 8):
        if tile_rows % cand == 0:
            chunk = cand
            break
    num_chunks = tile_rows // chunk

    num_tiles = pl.cdiv(rows, tile_rows)
    num_par = num_cores if num_tiles >= num_cores else 1
    steps = pl.cdiv(num_tiles, num_par)
    covered_rows = num_par * steps * tile_rows
    need_mask = covered_rows != rows

    if num_par * steps == num_tiles:
        in_idx = lambda ci, si: (ci * steps + si, 0)
    else:
        # Over-covered grid: clamp fully-OOB tile indices (their contribution
        # is zeroed by the gated in-kernel row mask).
        in_idx = lambda ci, si: (jnp.minimum(ci * steps + si, num_tiles - 1), 0)

    kernel = functools.partial(
        _mse_kernel, tile_rows=tile_rows, chunk=chunk, rows=rows, steps=steps,
        need_mask=need_mask, unroll=num_chunks <= 4)

    itemsize = jnp.dtype(pred.dtype).itemsize
    cost = pl.CostEstimate(
        flops=3 * n_main,
        transcendentals=0,
        bytes_accessed=2 * n_main * itemsize
        + num_par * _SUBLANES * _LANES * 4)

    partials = pl.pallas_call(
        kernel,
        out_shape=jax.ShapeDtypeStruct((num_par, _SUBLANES, _LANES),
                                       jnp.float32),
        grid_spec=pltpu.PrefetchScalarGridSpec(
            num_scalar_prefetch=0,
            grid=(num_par, steps),
            in_specs=[
                pl.BlockSpec((tile_rows, _LANES), in_idx),
                pl.BlockSpec((tile_rows, _LANES), in_idx),
            ],
            out_specs=pl.BlockSpec((1, _SUBLANES, _LANES),
                                   lambda ci, si: (ci, 0, 0)),
        ),
        compiler_params=pltpu.CompilerParams(
            dimension_semantics=("parallel", "arbitrary"),
            vmem_limit_bytes=vmem_limit),
        cost_estimate=cost,
    )(p2, t2)

    # Tiny final reduction + mean in plain JAX (sum / n, matching torch).
    return (jnp.sum(partials) + tail) / jnp.float32(n)


if __name__ == "__main__":
    key = jax.random.PRNGKey(0)

    # Primary example consistent with the module (batch=2, channels=4, 16x16).
    k1, k2 = jax.random.split(key)
    pred = jax.random.normal(k1, (2, 4, 16, 16), dtype=jnp.float32)
    target = jax.random.normal(k2, (2, 4, 16, 16), dtype=jnp.float32)

    loss = mse_criterion(pred, target)
    jax.block_until_ready(loss)
    ref = jnp.mean((pred - target) ** 2)
    assert jnp.allclose(loss, ref, rtol=1e-5, atol=1e-6), (loss, ref)

    # Extra small cases exercising: the 2-way split, ragged tile + clamped
    # grid + unaligned tail, rows < 8, and the multi-chunk fori_loop paths
    # (both masked and unmasked tiles).
    extra_cases = [
        ((8, 1024), dict(tile_rows=16, num_cores=2)),
        ((7, 683), dict(tile_rows=16, num_cores=2)),
        ((5, 128), dict()),
        ((3000, 128), dict(tile_rows=2048, num_cores=1)),
    ]
    for i, (shape, kw) in enumerate(extra_cases):
        ka, kb = jax.random.split(jax.random.PRNGKey(i + 1))
        a = jax.random.normal(ka, shape, dtype=jnp.float32)
        b = jax.random.normal(kb, shape, dtype=jnp.float32)
        got = mse_criterion(a, b, **kw)
        jax.block_until_ready(got)
        want = jnp.mean((a - b) ** 2)
        assert jnp.allclose(got, want, rtol=1e-5, atol=1e-6), (shape, got, want)

    print("KERNEL_OK")
</pallas_src>

<mosaic_0001>
module attributes {stable_mosaic.version = 11 : i64} {
  func.func @_mse_kernel(%arg0: i32, %arg1: i32, %arg2: memref<16x128xf32, #tpu.memory_space<vmem>>, %arg3: memref<16x128xf32, #tpu.memory_space<vmem>>, %arg4: memref<1x8x128xf32, #tpu.memory_space<vmem>>) attributes {dimension_semantics = [#tpu.dimension_semantics<parallel>, #tpu.dimension_semantics<arbitrary>], iteration_bounds = array<i64: 1, 1>, scalar_prefetch = 0 : i64, scratch_operands = 0 : i64, tpu.core_type = #tpu.core_type<tc>, window_params = [{transform_indices = @transform_0, window_bounds = array<i64: 16, 128>}, {transform_indices = @transform_1, window_bounds = array<i64: 16, 128>}, {transform_indices = @transform_2, window_bounds = array<i64: 1, 8, 128>}]} {
    %c0_i32 = arith.constant 0 : i32
    %0 = arith.cmpi eq, %arg1, %c0_i32 : i32
    %1 = arith.extui %0 : i1 to i32
    %c0_i32_0 = arith.constant 0 : i32
    %2 = arith.cmpi ne, %1, %c0_i32_0 : i32
    scf.if %2 {
      %cst_11 = arith.constant 0.000000e+00 : f32
      %15 = vector.broadcast %cst_11 : f32 to vector<1x8x128xf32>
      %c0_12 = arith.constant 0 : index
      %c0_13 = arith.constant 0 : index
      %c0_14 = arith.constant 0 : index
      %16 = vector.load %arg4[%c0_12, %c0_13, %c0_14] : memref<1x8x128xf32, #tpu.memory_space<vmem>>, vector<1x8x128xf32>
      tpu.vector_store %arg4[%c0_12, %c0_13, %c0_14], %15 {strides = array<i32>} : memref<1x8x128xf32, #tpu.memory_space<vmem>>, vector<1x8x128xf32>,
    } else {
    }
    %c0 = arith.constant 0 : index
    %c0_1 = arith.constant 0 : index
    %c0_2 = arith.constant 0 : index
    %3 = vector.load %arg4[%c0, %c0_1, %c0_2] : memref<1x8x128xf32, #tpu.memory_space<vmem>>, vector<1x8x128xf32>
    %cst = arith.constant 0.000000e+00 : f32
    %4 = vector.broadcast %cst : f32 to vector<8x128xf32>
    %c0_3 = arith.constant 0 : index
    %c0_4 = arith.constant 0 : index
    %5 = vector.load %arg2[%c0_3, %c0_4] : memref<16x128xf32, #tpu.memory_space<vmem>>, vector<16x128xf32>
    %c0_5 = arith.constant 0 : index
    %c0_6 = arith.constant 0 : index
    %6 = vector.load %arg3[%c0_5, %c0_6] : memref<16x128xf32, #tpu.memory_space<vmem>>, vector<16x128xf32>
    %7 = arith.subf %5, %6 : vector<16x128xf32>
    %8 = arith.mulf %7, %7 : vector<16x128xf32>
    %9 = vector.shape_cast %8 : vector<16x128xf32> to vector<2x8x128xf32>
    %cst_7 = arith.constant dense<0.000000e+00> : vector<8x128xf32>
    %10 = vector.multi_reduction <add>, %9, %cst_7 [0] : vector<2x8x128xf32> to vector<8x128xf32>
    %11 = arith.addf %4, %10 : vector<8x128xf32>
    %12 = vector.shape_cast %11 : vector<8x128xf32> to vector<1x8x128xf32>
    %13 = arith.addf %3, %12 : vector<1x8x128xf32>
    %c0_8 = arith.constant 0 : index
    %c0_9 = arith.constant 0 : index
    %c0_10 = arith.constant 0 : index
    %14 = vector.load %arg4[%c0_8, %c0_9, %c0_10] : memref<1x8x128xf32, #tpu.memory_space<vmem>>, vector<1x8x128xf32>
    tpu.vector_store %arg4[%c0_8, %c0_9, %c0_10], %13 {strides = array<i32>} : memref<1x8x128xf32, #tpu.memory_space<vmem>>, vector<1x8x128xf32>,
    return
  }
  func.func @transform_0(%arg0: i32, %arg1: i32) -> (i32, i32) {
    %c1_i32 = arith.constant 1 : i32
    %0 = arith.muli %arg0, %c1_i32 : i32
    %1 = arith.addi %0, %arg1 : i32
    %c0_i32 = arith.constant 0 : i32
    %c0_i32_0 = arith.constant 0 : i32
    return %1, %c0_i32 : i32, i32
  }
  func.func @transform_1(%arg0: i32, %arg1: i32) -> (i32, i32) {
    %c1_i32 = arith.constant 1 : i32
    %0 = arith.muli %arg0, %c1_i32 : i32
    %1 = arith.addi %0, %arg1 : i32
    %c0_i32 = arith.constant 0 : i32
    %c0_i32_0 = arith.constant 0 : i32
    return %1, %c0_i32 : i32, i32
  }
  func.func @transform_2(%arg0: i32, %arg1: i32) -> (i32, i32, i32) {
    %c0_i32 = arith.constant 0 : i32
    %c0_i32_0 = arith.constant 0 : i32
    %c0_i32_1 = arith.constant 0 : i32
    return %arg0, %c0_i32, %c0_i32_0 : i32, i32, i32
  }
}

</mosaic_0001>

<llo_original>
// kernel: tpu_custom_call.1
$region0: #{tpu_custom_call.1}
  #allocation0 [shape = 'u32[]', space=smem, size = 0x4, offset = 0x4, fixed_abs, tag = 'smem constant byte address 0x4 - core index']
  #allocation1 [shape = 'u32[144,128]{1,0:T(1,128)}', space=vmem, size = 0x12000, scoped, tag = 'internal scratch']
  %s0 = inlined_call_operand.hbm [shape: f32[16,128], index: 0, kind: input, shape index: {}]
  %s1 = inlined_call_operand.hbm [shape: f32[16,128], index: 1, kind: input, shape index: {}]
  %s2 = inlined_call_operand.hbm [shape: f32[1,8,128], index: 2, kind: output, shape index: {}]
  %s3 = sld [smem:[#allocation0]]
  $region30: #{tpu_custom_call.1} parent=0
    _
  %s5 = ssub.s32 1, %s3
  %s6 = scalar_select 0, %s5, %s3
  $region1: #{tpu_custom_call.1} parent=0
    #allocation2 [shape = 'u8[8192]{0}', space=vmem, size = 0x2000, scoped, tag = 'input window, operand 0, single buffered']
    #allocation3 [shape = 's32[1]{0}', space=sflag, size = 0x4, scoped, tag = 'scoped memory for tpu_custom_call.1']
    #allocation4 [shape = 's32[1]{0}', space=sflag, size = 0x4, scoped, tag = 'scoped memory for tpu_custom_call.1']
    #allocation5 [shape = 'u8[8192]{0}', space=vmem, size = 0x2000, scoped, tag = 'input window, operand 1, single buffered']
    #allocation6 [shape = 's32[1]{0}', space=sflag, size = 0x4, scoped, tag = 'scoped memory for tpu_custom_call.1']
    #allocation7 [shape = 'u8[4096]{0}', space=vmem, size = 0x1000, scoped, tag = 'output window, operand 0, single buffered']
    %7 = vsyncpa [#allocation3], 0
    %8 = vsyncpa [#allocation6], 0
    %9 = vsyncpa [#allocation4], 0
    // Predicated region
    $region2: #{tpu_custom_call.1} parent=1 // pred_check
      _
    $region3: #{tpu_custom_call.1} parent=1 // pred_check_branch
      %11 = sbr.rel (0) target = $region5
    $region4: #{tpu_custom_call.1} parent=1 // pred_region
      %s12 = sadd.s32 0, 0
      %s13 = smul.u32 2, %s12
      %s15 = ssub.s32 256, 256
      %16 = vsyncadd [#allocation3], %s15
      %s17 = smul.addr %s13, 128
      %s18 = scalar_lea.hbm %s0, %s17
      %s19 = sshll.u32 [#allocation2], 4
      %s20 = int_to_ptr.vmem [resolvable:$true] %s19
      %25 = dma.hbm_to_vmem [thread:$0]  %s18, 256, %s20, [#allocation3], 128, 128, 8
    $region5: #{tpu_custom_call.1} parent=1 // pred_fallthru
      _
    // Predicated region
    $region6: #{tpu_custom_call.1} parent=1 // pred_check
      _
    $region7: #{tpu_custom_call.1} parent=1 // pred_check_branch
      %27 = sbr.rel (0) target = $region9
    $region8: #{tpu_custom_call.1} parent=1 // pred_region
      %s28 = sadd.s32 0, 0
      %s29 = smul.u32 2, %s28
      %s31 = ssub.s32 256, 256
      %32 = vsyncadd [#allocation6], %s31
      %s33 = smul.addr %s29, 128
      %s34 = scalar_lea.hbm %s1, %s33
      %s35 = sshll.u32 [#allocation5], 4
      %s36 = int_to_ptr.vmem [resolvable:$true] %s35
      %41 = dma.hbm_to_vmem [thread:$0]  %s34, 256, %s36, [#allocation6], 128, 128, 8
    $region9: #{tpu_custom_call.1} parent=1 // pred_fallthru
      _
    // Predicated region
    $region10: #{tpu_custom_call.1} parent=1 // pred_check
      _
    $region11: #{tpu_custom_call.1} parent=1 // pred_check_branch
      %43 = sbr.rel (0) target = $region13
    $region12: #{tpu_custom_call.1} parent=1 // pred_region
      %44 = dma.done [#allocation3], 256
    $region13: #{tpu_custom_call.1} parent=1 // pred_fallthru
      _
    // Predicated region
    $region14: #{tpu_custom_call.1} parent=1 // pred_check
      _
    $region15: #{tpu_custom_call.1} parent=1 // pred_check_branch
      %46 = sbr.rel (0) target = $region17
    $region16: #{tpu_custom_call.1} parent=1 // pred_region
      %47 = dma.done [#allocation6], 256
    $region17: #{tpu_custom_call.1} parent=1 // pred_fallthru
      _
    %s48 = sadd.s32 0, 0
    %s49 = smul.u32 2, %s48
    %s50 = sadd.s32 0, 0
    %s51 = smul.u32 2, %s50
    %p52 = scmp.eq.s32.totalorder 0, 0
    // Predicated region
    $region18: #{tpu_custom_call.1} parent=1 // pred_check
      %p53 = pneg %p52
    $region19: #{tpu_custom_call.1} parent=1 // pred_check_branch
      %55 = sbr.rel (%p53) target = $region21
    $region20: #{tpu_custom_call.1} parent=1 // pred_region
      %56 = vst [vmem:[#allocation7] sm:$0xff] 0.0
    $region21: #{tpu_custom_call.1} parent=1 // pred_fallthru
      _
    %v57 = vld [vmem:[#allocation7] sm:$0xff]
    %v58 = vld [vmem:[#allocation2] sm:$0xff]
    %v59 = vld [vmem:[#allocation2 + $0x8] sm:$0xff]
    %v60 = vld [vmem:[#allocation5] sm:$0xff]
    %v61 = vld [vmem:[#allocation5 + $0x8] sm:$0xff]
    %v62 = vsub.f32 %v58, %v60
    %v63 = vsub.f32 %v59, %v61
    %v64 = vmul.f32 %v62, %v62
    %v65 = vmul.f32 %v63, %v63
    %v66 = vadd.f32 %v64, %v65
    %v67 = vadd.f32 %v66, 0.0
    %v68 = vadd.f32 %v57, %v67
    %69 = vst [vmem:[#allocation7] sm:$0xff] %v68
    // Predicated region
    $region22: #{tpu_custom_call.1} parent=1 // pred_check
      _
    $region23: #{tpu_custom_call.1} parent=1 // pred_check_branch
      %71 = sbr.rel (0) target = $region25
    $region24: #{tpu_custom_call.1} parent=1 // pred_region
      %s73 = ssub.s32 128, 128
      %74 = vsyncadd [#allocation4], %s73
      %s76 = sshll.u32 [#allocation7], 4
      %s77 = int_to_ptr.vmem [resolvable:$true] %s76
      %79 = dma.vmem_to_hbm [thread:$0]  %s77, 128, %s2, [#allocation4]
    $region25: #{tpu_custom_call.1} parent=1 // pred_fallthru
      _
    // Predicated region
    $region26: #{tpu_custom_call.1} parent=1 // pred_check
      _
    $region27: #{tpu_custom_call.1} parent=1 // pred_check_branch
      %81 = sbr.rel (0) target = $region29
    $region28: #{tpu_custom_call.1} parent=1 // pred_region
      %82 = dma.done [#allocation4], 128
    $region29: #{tpu_custom_call.1} parent=1 // pred_fallthru
      _
    %83 = vsyncpa [#allocation3], 1
    %84 = vsyncpa [#allocation6], 1
    %85 = vsyncpa [#allocation4], 1

</llo_original>
